<compile_context>
chip_gen: v7x
topology: tpu7x:2x2x1
jax: 0.10.0
libtpu: 0.0.40
codegen_flags: <defaults>
</compile_context>

<pallas_src>
import jax
import jax.numpy as jnp
from jax.experimental import pallas as pl
from jax.experimental.pallas import tpu as pltpu

LANE = 128
SUBLANE = 8


def _round_up(x, m):
    return ((x + m - 1) // m) * m


def beta_policy_kernel(x_ref, w_ref, o_ref):
    # One fused matmul: x_aug (TB, K_pad) @ W_fused (K_pad, OUT_COLS).
    # Bias is folded into the contraction (ones column in x, bias row in W),
    # so the epilogue is just softplus(z) + 1.
    z = jnp.dot(x_ref[...], w_ref[...], preferred_element_type=jnp.float32)
    o_ref[...] = (jnp.logaddexp(z, 0.0) + 1.0).astype(o_ref.dtype)


def beta_policy_layer(x, w_alpha, b_alpha, w_beta, b_beta, *, max_tile_rows=512):
    """x: (B, F); w_*: (F, A) (already transposed); b_*: (A,).

    Returns (alpha, beta), each (B, A) float32.
    """
    B, F = x.shape
    A = w_alpha.shape[1]

    out_cols = _round_up(2 * A, LANE)        # lane-dense output width (>= 128)
    k_pad = _round_up(F + 1, SUBLANE)        # contraction: F features + 1 bias row

    # ---- Fused, lane-padded weight with the bias folded in as a row --------
    w_fused = jnp.zeros((k_pad, out_cols), dtype=jnp.float32)
    w_fused = w_fused.at[:F, :A].set(w_alpha.astype(jnp.float32))
    w_fused = w_fused.at[:F, A:2 * A].set(w_beta.astype(jnp.float32))
    w_fused = w_fused.at[F, :A].set(b_alpha.astype(jnp.float32))
    w_fused = w_fused.at[F, A:2 * A].set(b_beta.astype(jnp.float32))

    # ---- Augment x with a ones column (bias) and pad rows to the tile ------
    tb = min(max_tile_rows, _round_up(B, SUBLANE))
    b_pad = _round_up(B, tb)
    x_aug = jnp.zeros((b_pad, k_pad), dtype=jnp.float32)
    x_aug = x_aug.at[:B, :F].set(x.astype(jnp.float32))
    x_aug = x_aug.at[:B, F].set(1.0)         # ones column -> picks up bias row

    grid = (b_pad // tb,)
    fused = pl.pallas_call(
        beta_policy_kernel,
        out_shape=jax.ShapeDtypeStruct((b_pad, out_cols), jnp.float32),
        grid=grid,
        in_specs=[
            pl.BlockSpec((tb, k_pad), lambda i: (i, 0)),          # x row tile
            pl.BlockSpec((k_pad, out_cols), lambda i: (0, 0)),    # resident weights
        ],
        out_specs=pl.BlockSpec((tb, out_cols), lambda i: (i, 0)),
        compiler_params=pltpu.CompilerParams(
            dimension_semantics=("parallel",)),
    )(x_aug, w_fused)

    alpha = fused[:B, :A]
    beta = fused[:B, A:2 * A]
    return alpha, beta


if __name__ == "__main__":
    # Shapes consistent with the module's example: hidden features -> action dims
    batch = 4
    in_features = 16
    action_dims = 4

    key = jax.random.PRNGKey(0)
    kx, kwa, kba, kwb, kbb = jax.random.split(key, 5)

    # Deterministic nn.Linear-style init (uniform bound 1/sqrt(fan_in)).
    bound = 1.0 / jnp.sqrt(in_features)
    x = jax.random.normal(kx, (batch, in_features), dtype=jnp.float32)
    # weights stored already transposed to (in_features, action_dims)
    w_alpha = jax.random.uniform(kwa, (in_features, action_dims),
                                 minval=-bound, maxval=bound, dtype=jnp.float32)
    b_alpha = jax.random.uniform(kba, (action_dims,),
                                 minval=-bound, maxval=bound, dtype=jnp.float32)
    w_beta = jax.random.uniform(kwb, (in_features, action_dims),
                                minval=-bound, maxval=bound, dtype=jnp.float32)
    b_beta = jax.random.uniform(kbb, (action_dims,),
                                minval=-bound, maxval=bound, dtype=jnp.float32)

    alpha, beta = beta_policy_layer(x, w_alpha, b_alpha, w_beta, b_beta)
    jax.block_until_ready((alpha, beta))

    # Pure-JAX reference check
    ref_alpha = jax.nn.softplus(x @ w_alpha + b_alpha) + 1.0
    ref_beta = jax.nn.softplus(x @ w_beta + b_beta) + 1.0
    assert jnp.allclose(alpha, ref_alpha, atol=1e-5, rtol=1e-5)
    assert jnp.allclose(beta, ref_beta, atol=1e-5, rtol=1e-5)
    # Beta params are >= 1 by construction (softplus can underflow to exactly 0
    # for very negative pre-activations, matching torch Softplus semantics).
    assert bool(jnp.all(alpha >= 1.0)) and bool(jnp.all(beta >= 1.0))

    # TODO(synk): the IndyBeta distribution wrapper (sampling / log_prob) is
    # host-side and not part of the kernel; only the parameter computation is
    # implemented here.
    print("KERNEL_OK")
</pallas_src>

<mosaic_0001>
module attributes {stable_mosaic.version = 11 : i64} {
  func.func @beta_policy_kernel(%arg0: i32, %arg1: memref<8x24xf32, #tpu.memory_space<vmem>>, %arg2: memref<24x128xf32, #tpu.memory_space<vmem>>, %arg3: memref<8x128xf32, #tpu.memory_space<vmem>>) attributes {dimension_semantics = [#tpu.dimension_semantics<parallel>], iteration_bounds = array<i64: 1>, scalar_prefetch = 0 : i64, scratch_operands = 0 : i64, tpu.core_type = #tpu.core_type<tc>, window_params = [{transform_indices = @transform_0, window_bounds = array<i64: 8, 24>}, {pipeline_mode = #tpu.pipeline_mode<synchronous>, transform_indices = @transform_1, window_bounds = array<i64: 24, 128>}, {transform_indices = @transform_2, window_bounds = array<i64: 8, 128>}]} {
    %c0 = arith.constant 0 : index
    %c0_0 = arith.constant 0 : index
    %0 = vector.load %arg1[%c0, %c0_0] : memref<8x24xf32, #tpu.memory_space<vmem>>, vector<8x24xf32>
    %c0_1 = arith.constant 0 : index
    %c0_2 = arith.constant 0 : index
    %1 = vector.load %arg2[%c0_1, %c0_2] : memref<24x128xf32, #tpu.memory_space<vmem>>, vector<24x128xf32>
    %cst = arith.constant dense<0.000000e+00> : vector<8x128xf32>
    %2 = tpu.matmul %0, %1, %cst {dimension_numbers = #tpu.dot_dimension_numbers<[1], [0], [0], [1], [0, 0, 1, 1], [], []>} : vector<8x24xf32>, vector<24x128xf32>, vector<8x128xf32> -> vector<8x128xf32>
    %cst_3 = arith.constant 0.000000e+00 : f32
    %3 = vector.broadcast %cst_3 : f32 to vector<8x128xf32>
    %4 = arith.maximumf %2, %3 : vector<8x128xf32>
    %5 = vector.broadcast %cst_3 : f32 to vector<8x128xf32>
    %6 = arith.subf %2, %5 : vector<8x128xf32>
    %7 = arith.cmpf one, %6, %6 : vector<8x128xf32>
    %8 = vector.broadcast %cst_3 : f32 to vector<8x128xf32>
    %9 = arith.addf %2, %8 : vector<8x128xf32>
    %10 = math.absf %6 : vector<8x128xf32>
    %cst_4 = arith.constant 0.000000e+00 : f32
    %11 = vector.broadcast %cst_4 : f32 to vector<8x128xf32>
    %12 = arith.subf %11, %10 : vector<8x128xf32>
    %13 = math.exp %12 : vector<8x128xf32>
    %14 = math.log1p %13 : vector<8x128xf32>
    %15 = arith.addf %4, %14 : vector<8x128xf32>
    %16 = arith.select %7, %9, %15 : vector<8x128xi1>, vector<8x128xf32>
    %cst_5 = arith.constant 1.000000e+00 : f32
    %17 = vector.broadcast %cst_5 : f32 to vector<8x128xf32>
    %18 = arith.addf %16, %17 : vector<8x128xf32>
    %c0_6 = arith.constant 0 : index
    %c0_7 = arith.constant 0 : index
    %19 = vector.load %arg3[%c0_6, %c0_7] : memref<8x128xf32, #tpu.memory_space<vmem>>, vector<8x128xf32>
    tpu.vector_store %arg3[%c0_6, %c0_7], %18 {strides = array<i32>} : memref<8x128xf32, #tpu.memory_space<vmem>>, vector<8x128xf32>,
    return
  }
  func.func @transform_0(%arg0: i32) -> (i32, i32) {
    %c0_i32 = arith.constant 0 : i32
    %c0_i32_0 = arith.constant 0 : i32
    return %arg0, %c0_i32 : i32, i32
  }
  func.func @transform_1(%arg0: i32) -> (i32, i32) {
    %c0_i32 = arith.constant 0 : i32
    %c0_i32_0 = arith.constant 0 : i32
    %c0_i32_1 = arith.constant 0 : i32
    return %c0_i32, %c0_i32_0 : i32, i32
  }
  func.func @transform_2(%arg0: i32) -> (i32, i32) {
    %c0_i32 = arith.constant 0 : i32
    %c0_i32_0 = arith.constant 0 : i32
    return %arg0, %c0_i32 : i32, i32
  }
}

</mosaic_0001>

<llo_original>
// kernel: tpu_custom_call.1
$region0: #{tpu_custom_call.1}
  #allocation0 [shape = 'u32[]', space=smem, size = 0x4, offset = 0x4, fixed_abs, tag = 'smem constant byte address 0x4 - core index']
  #allocation1 [shape = 'u32[144,128]{1,0:T(1,128)}', space=vmem, size = 0x12000, scoped, tag = 'internal scratch']
  %s0 = inlined_call_operand.hbm [shape: f32[8,24], index: 0, kind: input, shape index: {}]
  %s1 = inlined_call_operand.hbm [shape: f32[24,128], index: 1, kind: input, shape index: {}]
  %s2 = inlined_call_operand.hbm [shape: f32[8,128], index: 2, kind: output, shape index: {}]
  %s3 = sld [smem:[#allocation0]]
  $region26: #{tpu_custom_call.1} parent=0
    _
  %s5 = ssub.s32 1, %s3
  %s6 = scalar_select 0, %s5, %s3
  $region1: #{tpu_custom_call.1} parent=0
    #allocation2 [shape = 'u8[4096]{0}', space=vmem, size = 0x1000, scoped, tag = 'input window, operand 0, single buffered']
    #allocation3 [shape = 's32[1]{0}', space=sflag, size = 0x4, scoped, tag = 'scoped memory for tpu_custom_call.1']
    #allocation4 [shape = 's32[1]{0}', space=sflag, size = 0x4, scoped, tag = 'scoped memory for tpu_custom_call.1']
    #allocation5 [shape = 'u8[12288]{0}', space=vmem, size = 0x3000, scoped, tag = 'input window, operand 1, single buffered']
    #allocation6 [shape = 's32[1]{0}', space=sflag, size = 0x4, scoped, tag = 'scoped memory for tpu_custom_call.1']
    #allocation7 [shape = 'u8[4096]{0}', space=vmem, size = 0x1000, scoped, tag = 'output window, operand 0, single buffered']
    %7 = vsyncpa [#allocation3], 0
    %8 = vsyncpa [#allocation6], 0
    %9 = vsyncpa [#allocation4], 0
    // Predicated region
    $region2: #{tpu_custom_call.1} parent=1 // pred_check
      _
    $region3: #{tpu_custom_call.1} parent=1 // pred_check_branch
      %11 = sbr.rel (0) target = $region5
    $region4: #{tpu_custom_call.1} parent=1 // pred_region
      %s13 = ssub.s32 128, 128
      %14 = vsyncadd [#allocation3], %s13
      %s16 = sshll.u32 [#allocation2], 4
      %s17 = int_to_ptr.vmem [resolvable:$true] %s16
      %19 = dma.hbm_to_vmem [thread:$0]  %s0, 128, %s17, [#allocation3]
    $region5: #{tpu_custom_call.1} parent=1 // pred_fallthru
      _
    // Predicated region
    $region6: #{tpu_custom_call.1} parent=1 // pred_check
      _
    $region7: #{tpu_custom_call.1} parent=1 // pred_check_branch
      %21 = sbr.rel (0) target = $region9
    $region8: #{tpu_custom_call.1} parent=1 // pred_region
      %s23 = ssub.s32 384, 384
      %24 = vsyncadd [#allocation6], %s23
      %s25 = sshll.u32 [#allocation5], 4
      %s26 = int_to_ptr.vmem [resolvable:$true] %s25
      %31 = dma.hbm_to_vmem [thread:$0]  %s1, 384, %s26, [#allocation6], 128, 128, 8
    $region9: #{tpu_custom_call.1} parent=1 // pred_fallthru
      _
    // Predicated region
    $region10: #{tpu_custom_call.1} parent=1 // pred_check
      _
    $region11: #{tpu_custom_call.1} parent=1 // pred_check_branch
      %33 = sbr.rel (0) target = $region13
    $region12: #{tpu_custom_call.1} parent=1 // pred_region
      %34 = dma.done [#allocation3], 128
    $region13: #{tpu_custom_call.1} parent=1 // pred_fallthru
      _
    // Predicated region
    $region14: #{tpu_custom_call.1} parent=1 // pred_check
      _
    $region15: #{tpu_custom_call.1} parent=1 // pred_check_branch
      %36 = sbr.rel (0) target = $region17
    $region16: #{tpu_custom_call.1} parent=1 // pred_region
      %37 = dma.done [#allocation6], 384
    $region17: #{tpu_custom_call.1} parent=1 // pred_fallthru
      _
    %v38 = vld [vmem:[#allocation2] sm:$0xff]
    %v39 = vld [vmem:[#allocation5] sm:$0xff]
    %v40 = vld [vmem:[#allocation5 + $0x8] sm:$0xff]
    %v41 = vld [vmem:[#allocation5 + $0x10] sm:$0xff]
    %vm42 = vcmask 195584
    %v44 = vsel %vm42, %v38, 0
    %46 = vmatprep.subr.mxu0 0.0
    %47 = vmatpush1.msra.mxu0 %v39
    %48 = vmatprep.subr.mxu0 0.0
    %49 = vmatpush1.msra.mxu0 %v40
    %50 = vmatprep.subr.mxu0 0.0
    %51 = vmatpush1.msra.mxu0 %v41
    %52 = vmatprep.subr.mxu0 0.0
    %53 = vmatpush1.msra.mxu0 0.0
    %54 = vmatprep.subr.mxu0 0.0
    %55 = vmatpush1.msra.mxu0 0.0
    %56 = vmatprep.subr.mxu0 0.0
    %57 = vmatpush1.msra.mxu0 0.0
    %58 = vmatprep.subr.mxu0 0.0
    %59 = vmatpush1.msra.mxu0 0.0
    %60 = vmatprep.subr.mxu0 0.0
    %61 = vmatpush1.msra.mxu0 0.0
    %62 = vmatprep.subr.mxu0 0.0
    %63 = vmatpush1.msra.mxu0 0.0
    %64 = vmatprep.subr.mxu0 0.0
    %65 = vmatpush1.msra.mxu0 0.0
    %66 = vmatprep.subr.mxu0 0.0
    %67 = vmatpush1.msra.mxu0 0.0
    %68 = vmatprep.subr.mxu0 0.0
    %69 = vmatpush1.msra.mxu0 0.0
    %70 = vmatprep.subr.mxu0 0.0
    %71 = vmatpush1.msra.mxu0 0.0
    %72 = vmatprep.subr.mxu0 0.0
    %73 = vmatpush1.msra.mxu0 0.0
    %74 = vmatprep.subr.mxu0 0.0
    %75 = vmatpush1.msra.mxu0 0.0
    %76 = vmatprep.subr.mxu0 0.0
    %77 = vmatpush1.msra.mxu0 0.0
    %78 = vmatprep.subr.mxu0 0.0
    %79 = vmatpush1.msra.mxu0 0.0
    %80 = vmatprep.subr.mxu0 0.0
    %81 = vmatpush1.msra.mxu0 0.0
    %82 = vmatprep.subr.mxu0 0.0
    %83 = vmatpush1.msra.mxu0 0.0
    %84 = vmatprep.subr.mxu0 0.0
    %85 = vmatpush1.msra.mxu0 0.0
    %86 = vmatprep.subr.mxu0 0.0
    %87 = vmatpush1.msra.mxu0 0.0
    %88 = vmatprep.subr.mxu0 0.0
    %89 = vmatpush1.msra.mxu0 0.0
    %90 = vmatprep.subr.mxu0 0.0
    %91 = vmatpush1.msra.mxu0 0.0
    %92 = vmatprep.subr.mxu0 0.0
    %93 = vmatpush1.msra.mxu0 0.0
    %94 = vmatprep.subr.mxu0 0.0
    %95 = vmatpush1.msra.mxu0 0.0
    %96 = vmatprep.subr.mxu0 0.0
    %97 = vmatpush1.msra.mxu0 0.0
    %98 = vmatprep.subr.mxu0 0.0
    %99 = vmatpush1.msra.mxu0 0.0
    %100 = vmatprep.subr.mxu0 0.0
    %101 = vmatpush1.msra.mxu0 0.0
    %102 = vmatprep.subr.mxu0 0.0
    %103 = vmatpush1.msra.mxu0 0.0
    %104 = vmatprep.subr.mxu0 0.0
    %105 = vmatpush1.msra.mxu0 0.0
    %106 = vmatprep.subr.mxu0 0.0
    %107 = vmatpush1.msra.mxu0 0.0
    %108 = vmatprep.subr.mxu0 0.0
    %109 = vmatpush1.msra.mxu0 0.0
    %110 = vmatprep.mubr.f32.mxu0 0.0
    %111 = vmatmul.mubr.f32.gmra.mrb[0].mxu0 %v44
    %v112 = vpop.f32.mrb[0].mxu0
    %v113 = vadd.f32 0.0, %v112
    %v114 = vpop.f32.mrb[0].mxu0
    %115 = vdwg.mxu0
    %v116 = vmax.f32 %v113, 0.0
    %vm117 = vcmp.ne.f32.partialorder %v113, %v113
    %v118 = vadd.f32 %v113, 0.0
    %v119 = vand.u32 2147483647, %v113
    %v120 = vsub.f32 0.0, %v119
    %v121 = vmul.f32 %v120, 1.442695
    %v122 = vpow.pop %v121
    %v123 = vadd.f32 %v122, 1.0
    %v124 = vlog2.pop %v123
    %v125 = vmul.f32 %v124, 0.6931472
    %v126 = vmul.f32 -0.5, %v122
    %v127 = vadd.f32 %v126, 1.0
    %v128 = vmul.f32 %v127, %v122
    %v129 = vand.u32 2147483647, %v122
    %vm130 = vcmp.lt.f32.partialorder %v129, 0.0004427343
    %v131 = vsel %vm130, %v128, %v125
    %v132 = vadd.f32 %v116, %v131
    %v133 = vsel %vm117, %v118, %v132
    %v134 = vadd.f32 %v133, 1.0
    %135 = vst [vmem:[#allocation7] sm:$0xff] %v134
    // Predicated region
    $region18: #{tpu_custom_call.1} parent=1 // pred_check
      _
    $region19: #{tpu_custom_call.1} parent=1 // pred_check_branch
      %137 = sbr.rel (0) target = $region21
    $region20: #{tpu_custom_call.1} parent=1 // pred_region
      %s139 = ssub.s32 128, 128
      %140 = vsyncadd [#allocation4], %s139
      %s142 = sshll.u32 [#allocation7], 4
      %s143 = int_to_ptr.vmem [resolvable:$true] %s142
      %145 = dma.vmem_to_hbm [thread:$0]  %s143, 128, %s2, [#allocation4]
    $region21: #{tpu_custom_call.1} parent=1 // pred_fallthru
      _
    // Predicated region
    $region22: #{tpu_custom_call.1} parent=1 // pred_check
      _
    $region23: #{tpu_custom_call.1} parent=1 // pred_check_branch
      %147 = sbr.rel (0) target = $region25
    $region24: #{tpu_custom_call.1} parent=1 // pred_region
      %148 = dma.done [#allocation4], 128
    $region25: #{tpu_custom_call.1} parent=1 // pred_fallthru
      _
    %149 = vsyncpa [#allocation3], 1
    %150 = vsyncpa [#allocation6], 1
    %151 = vsyncpa [#allocation4], 1

</llo_original>
